<compile_context>
chip_gen: v7x
topology: tpu7x:2x2x1
jax: 0.10.0
libtpu: 0.0.40
codegen_flags: <defaults>
</compile_context>

<pallas_src>
import numpy as np
import jax
import jax.numpy as jnp
from jax import lax
from jax.experimental import pallas as pl
from jax.experimental.pallas import tpu as pltpu

# ----- small, module-consistent sizes ---------------------------------------
MODEL_DIM = 32
NUM_HEADS = 4
DIM_PER_HEAD = MODEL_DIM // NUM_HEADS          # 8
FFN_DIM = 64
NUM_LAYERS = 2
TAG_SIZE = 7
VOCAB_SIZE = 50
MAX_SEQ_LEN = 16
SEQ_LEN = 8
LN_EPS = 1e-5

# ----- packed-slab layout (single lane-dense [TOTAL_ROWS, 128] f32 operand) --
LANES = 128
EMB_ROWS = 64                                   # V+1 = 51, padded to sublane mult.
VEC_ROWS = 8                                    # per-layer bias/LN vector block

R_EMB = 0                                       # [64, 32]  embedding table (padded)
R_POS = R_EMB + EMB_ROWS                        # [L, 32]   positional rows 1..L
R_WMHA = R_POS + SEQ_LEN                        # per layer [32, 32]  wv @ wf
R_W1 = R_WMHA + NUM_LAYERS * MODEL_DIM          # per layer [32, 64]  ffn w1
R_W2 = R_W1 + NUM_LAYERS * MODEL_DIM            # per layer [64, 32]  ffn w2
R_VEC = R_W2 + NUM_LAYERS * FFN_DIM             # per layer [8 rows]  biases / LN
R_WOUT = R_VEC + NUM_LAYERS * VEC_ROWS          # [32, 128] = [I_32 | wr | 0]
R_BOUT = R_WOUT + MODEL_DIM                     # [1, 128]  = [0 | br | 0]
TOTAL_ROWS = R_BOUT + 8                         # 384 rows -> 192 KiB slab


# ----- fused Pallas kernel ----------------------------------------------------
def encoder_fused_kernel(ids_ref, slab_ref, out_ref):
    L = SEQ_LEN

    # --- embedding gather: VPU one-hot + one MXU matmul -----------------------
    ids = ids_ref[...]                                                 # [L, 1] i32
    iota = lax.broadcasted_iota(jnp.int32, (L, EMB_ROWS), 1)
    onehot = (iota == ids).astype(jnp.float32)                         # [L, 64]

    emb = slab_ref[R_EMB:R_EMB + EMB_ROWS, 0:MODEL_DIM]                # [64, 32]
    pos = slab_ref[R_POS:R_POS + L, 0:MODEL_DIM]                       # [L, 32]
    x = jnp.dot(onehot, emb, preferred_element_type=jnp.float32) + pos  # [L, 32]

    def layer_norm(h, g, b):
        mu = jnp.mean(h, axis=-1, keepdims=True)
        var = jnp.mean(jnp.square(h - mu), axis=-1, keepdims=True)
        return (h - mu) * lax.rsqrt(var + LN_EPS) * g + b

    # --- both encoder layers, statically unrolled -----------------------------
    for layer in range(NUM_LAYERS):
        w_mha = slab_ref[R_WMHA + layer * MODEL_DIM:
                         R_WMHA + (layer + 1) * MODEL_DIM, 0:MODEL_DIM]
        w1 = slab_ref[R_W1 + layer * MODEL_DIM:
                      R_W1 + (layer + 1) * MODEL_DIM, 0:FFN_DIM]
        w2 = slab_ref[R_W2 + layer * FFN_DIM:
                      R_W2 + (layer + 1) * FFN_DIM, 0:MODEL_DIM]
        v0 = R_VEC + layer * VEC_ROWS
        b_mha = slab_ref[v0 + 0:v0 + 1, 0:MODEL_DIM]
        g1 = slab_ref[v0 + 1:v0 + 2, 0:MODEL_DIM]
        bln1 = slab_ref[v0 + 2:v0 + 3, 0:MODEL_DIM]
        b1 = slab_ref[v0 + 3:v0 + 4, 0:FFN_DIM]
        b2 = slab_ref[v0 + 4:v0 + 5, 0:MODEL_DIM]
        g2 = slab_ref[v0 + 5:v0 + 6, 0:MODEL_DIM]
        bln2 = slab_ref[v0 + 6:v0 + 7, 0:MODEL_DIM]

        # MultiHeadAttention: attention == 1 exactly (length-1 key axis), so
        # context == linear_v(x) and linear_final folds in: one matmul total.
        mha = jnp.dot(x, w_mha, preferred_element_type=jnp.float32) + b_mha
        y = layer_norm(x + mha, g1, bln1)

        # PositionalWiseFeedForward (1x1 Conv1d == pointwise linear)
        f = jnp.maximum(jnp.dot(y, w1, preferred_element_type=jnp.float32) + b1, 0.0)
        f = jnp.dot(f, w2, preferred_element_type=jnp.float32) + b2
        x = layer_norm(y + f, g2, bln2)

    # --- single lane-dense output: [x | x@wr+br | 0] in one matmul ------------
    w_out = slab_ref[R_WOUT:R_WOUT + MODEL_DIM, :]                     # [32, 128]
    b_out = slab_ref[R_BOUT:R_BOUT + 1, :]                             # [1, 128]
    out_ref[...] = jnp.dot(x, w_out, preferred_element_type=jnp.float32) + b_out


# ----- parameter construction --------------------------------------------------
def make_positional_encoding(d_model, max_seq_len):
    pe = np.array([[pos / np.power(10000, 2.0 * (j // 2) / d_model)
                    for j in range(d_model)] for pos in range(max_seq_len)])
    pe[:, 0::2] = np.sin(pe[:, 0::2])
    pe[:, 1::2] = np.cos(pe[:, 1::2])
    pad = np.zeros((1, d_model))
    return np.concatenate([pad, pe], axis=0)          # row 0 is the pad row


def init_params(key):
    def lin(k, fan_in, fan_out):
        k1, k2 = jax.random.split(k)
        w = jax.random.normal(k1, (fan_in, fan_out), jnp.float32) * 0.05
        b = jax.random.normal(k2, (1, fan_out), jnp.float32) * 0.05
        return w, b

    keys = jax.random.split(key, NUM_LAYERS + 2)
    layers = []
    for li in range(NUM_LAYERS):
        ks = jax.random.split(keys[li], 6)
        # wq/wk kept only for parameter parity with the nn.Module; they do not
        # affect any output (attention is exactly 1) and are never used.
        wq, bq = lin(ks[0], MODEL_DIM, MODEL_DIM)
        wk, bk = lin(ks[1], MODEL_DIM, MODEL_DIM)
        wv, bv = lin(ks[2], MODEL_DIM, MODEL_DIM)
        wf, bf = lin(ks[3], MODEL_DIM, MODEL_DIM)
        w1, b1 = lin(ks[4], MODEL_DIM, FFN_DIM)       # Conv1d(D, F, 1) as [in,out]
        w2, b2 = lin(ks[5], FFN_DIM, MODEL_DIM)       # Conv1d(F, D, 1) as [in,out]
        layers.append(dict(
            wq=wq, bq=bq, wk=wk, bk=bk, wv=wv, bv=bv, wf=wf, bf=bf,
            g1=jnp.ones((1, MODEL_DIM), jnp.float32),
            b_ln1=jnp.zeros((1, MODEL_DIM), jnp.float32),
            w1=w1, b1=b1, w2=w2, b2=b2,
            g2=jnp.ones((1, MODEL_DIM), jnp.float32),
            b_ln2=jnp.zeros((1, MODEL_DIM), jnp.float32),
        ))
    emb = jax.random.normal(keys[NUM_LAYERS], (VOCAB_SIZE + 1, MODEL_DIM),
                            jnp.float32) * 0.1
    emb = emb.at[0].set(0.0)                          # padding_idx=0
    wr, br = lin(keys[NUM_LAYERS + 1], MODEL_DIM, TAG_SIZE)
    pos = jnp.asarray(make_positional_encoding(MODEL_DIM, MAX_SEQ_LEN), jnp.float32)
    return dict(layers=layers, emb=emb, wr=wr, br=br, pos=pos)


def fuse_params(params, seq_len):
    """Pack every model constant into one lane-dense [TOTAL_ROWS, 128] f32 slab."""
    assert seq_len == SEQ_LEN
    slab = jnp.zeros((TOTAL_ROWS, LANES), jnp.float32)
    slab = slab.at[R_EMB:R_EMB + VOCAB_SIZE + 1, 0:MODEL_DIM].set(params["emb"])
    slab = slab.at[R_POS:R_POS + seq_len, 0:MODEL_DIM].set(
        params["pos"][1:seq_len + 1])                 # positions 1..L (pad row skipped)

    for li, layer in enumerate(params["layers"]):
        # Fold MHA: (x@wv+bv)@wf+bf == x@(wv@wf) + (bv@wf+bf)
        w_mha = layer["wv"] @ layer["wf"]
        b_mha = layer["bv"] @ layer["wf"] + layer["bf"]
        slab = slab.at[R_WMHA + li * MODEL_DIM:
                       R_WMHA + (li + 1) * MODEL_DIM, 0:MODEL_DIM].set(w_mha)
        slab = slab.at[R_W1 + li * MODEL_DIM:
                       R_W1 + (li + 1) * MODEL_DIM, 0:FFN_DIM].set(layer["w1"])
        slab = slab.at[R_W2 + li * FFN_DIM:
                       R_W2 + (li + 1) * FFN_DIM, 0:MODEL_DIM].set(layer["w2"])
        v0 = R_VEC + li * VEC_ROWS
        slab = slab.at[v0 + 0, 0:MODEL_DIM].set(b_mha[0])
        slab = slab.at[v0 + 1, 0:MODEL_DIM].set(layer["g1"][0])
        slab = slab.at[v0 + 2, 0:MODEL_DIM].set(layer["b_ln1"][0])
        slab = slab.at[v0 + 3, 0:FFN_DIM].set(layer["b1"][0])
        slab = slab.at[v0 + 4, 0:MODEL_DIM].set(layer["b2"][0])
        slab = slab.at[v0 + 5, 0:MODEL_DIM].set(layer["g2"][0])
        slab = slab.at[v0 + 6, 0:MODEL_DIM].set(layer["b_ln2"][0])

    # Final projection producing the merged [x | x@wr+br | 0] output in one matmul.
    w_out = jnp.zeros((MODEL_DIM, LANES), jnp.float32)
    w_out = w_out.at[:, 0:MODEL_DIM].set(jnp.eye(MODEL_DIM, dtype=jnp.float32))
    w_out = w_out.at[:, MODEL_DIM:MODEL_DIM + TAG_SIZE].set(params["wr"])
    b_out = jnp.zeros((LANES,), jnp.float32)
    b_out = b_out.at[MODEL_DIM:MODEL_DIM + TAG_SIZE].set(params["br"][0])
    slab = slab.at[R_WOUT:R_WOUT + MODEL_DIM, :].set(w_out)
    slab = slab.at[R_BOUT, :].set(b_out)
    return slab


# ----- forward ------------------------------------------------------------------
def encoder_forward(slab, inputs, inputs_len):
    """inputs: [L] int token ids; inputs_len: python int == L (single sequence)."""
    assert inputs_len == SEQ_LEN == inputs.shape[0]
    ids = inputs.astype(jnp.int32).reshape(inputs_len, 1)
    vmem = pl.BlockSpec(memory_space=pltpu.MemorySpace.VMEM)

    out = pl.pallas_call(
        encoder_fused_kernel,
        out_shape=jax.ShapeDtypeStruct((inputs_len, LANES), jnp.float32),
        in_specs=[vmem, vmem],
        out_specs=vmem,
    )(ids, slab)

    output = out[:, :MODEL_DIM]
    result = out[:, MODEL_DIM:MODEL_DIM + TAG_SIZE]
    # Reference attention == softmax over a length-1 axis == exactly 1.0, shape
    # [L*H, 1, 1] per layer; reproduce it with zero kernel work.
    attentions = [jnp.ones((inputs_len * NUM_HEADS, 1, 1), jnp.float32)
                  for _ in range(NUM_LAYERS)]
    return result, output, attentions


# ----- pure-JAX reference (un-folded math) for a tolerance check -----------------
def reference_forward(params, inputs, seq_len):
    def ln(h, g, b):
        mu = jnp.mean(h, axis=-1, keepdims=True)
        var = jnp.mean(jnp.square(h - mu), axis=-1, keepdims=True)
        return (h - mu) * lax.rsqrt(var + LN_EPS) * g + b

    x = params["emb"][inputs] + params["pos"][1:seq_len + 1]
    for layer in params["layers"]:
        v = x @ layer["wv"] + layer["bv"]
        mha = v @ layer["wf"] + layer["bf"]
        y = ln(x + mha, layer["g1"], layer["b_ln1"])
        f = jnp.maximum(y @ layer["w1"] + layer["b1"], 0.0)
        f = f @ layer["w2"] + layer["b2"]
        x = ln(y + f, layer["g2"], layer["b_ln2"])
    return x @ params["wr"] + params["br"], x


if __name__ == "__main__":
    key = jax.random.PRNGKey(0)
    pkey, dkey = jax.random.split(key)
    params = init_params(pkey)
    slab = fuse_params(params, SEQ_LEN)
    inputs = jax.random.randint(dkey, (SEQ_LEN,), 1, VOCAB_SIZE + 1, dtype=jnp.int32)

    result, output, attentions = encoder_forward(slab, inputs, SEQ_LEN)
    jax.block_until_ready((result, output, attentions))

    assert result.shape == (SEQ_LEN, TAG_SIZE)
    assert output.shape == (SEQ_LEN, MODEL_DIM)
    assert len(attentions) == NUM_LAYERS
    assert all(a.shape == (SEQ_LEN * NUM_HEADS, 1, 1) for a in attentions)
    assert bool(jnp.all(jnp.isfinite(result)))
    assert bool(jnp.all(jnp.isfinite(output)))

    # semantics check vs. un-folded pure-JAX math (fold reorders f32 rounding,
    # so compare with a small tolerance rather than bit-exactly)
    ref_result, ref_output = reference_forward(params, inputs, SEQ_LEN)
    assert bool(jnp.allclose(result, ref_result, rtol=1e-4, atol=1e-4))
    assert bool(jnp.allclose(output, ref_output, rtol=1e-4, atol=1e-4))

    print("KERNEL_OK")
</pallas_src>

<mosaic_0001>
module attributes {stable_mosaic.version = 11 : i64} {
  func.func @encoder_fused_kernel(%arg0: memref<8x1xi32, #tpu.memory_space<vmem>>, %arg1: memref<384x128xf32, #tpu.memory_space<vmem>>, %arg2: memref<8x128xf32, #tpu.memory_space<vmem>>) attributes {dimension_semantics = [], scalar_prefetch = 0 : i64, scratch_operands = 0 : i64, tpu.core_type = #tpu.core_type<tc>} {
    %c0 = arith.constant 0 : index
    %c0_0 = arith.constant 0 : index
    %0 = vector.load %arg0[%c0, %c0_0] : memref<8x1xi32, #tpu.memory_space<vmem>>, vector<8x1xi32>
    %1 = tpu.iota {dimensions = array<i32: 1>} : vector<8x64xi32>
    %2 = vector.broadcast %0 : vector<8x1xi32> to vector<8x64xi32>
    %3 = arith.cmpi eq, %1, %2 : vector<8x64xi32>
    %4 = arith.extui %3 : vector<8x64xi1> to vector<8x64xi32>
    %5 = arith.sitofp %4 : vector<8x64xi32> to vector<8x64xf32>
    %c0_1 = arith.constant 0 : index
    %c0_2 = arith.constant 0 : index
    %6 = vector.load %arg1[%c0_1, %c0_2] : memref<384x128xf32, #tpu.memory_space<vmem>>, vector<64x32xf32>
    %c64 = arith.constant 64 : index
    %c0_3 = arith.constant 0 : index
    %7 = vector.load %arg1[%c64, %c0_3] : memref<384x128xf32, #tpu.memory_space<vmem>>, vector<8x32xf32>
    %cst = arith.constant dense<0.000000e+00> : vector<8x32xf32>
    %8 = tpu.matmul %5, %6, %cst {dimension_numbers = #tpu.dot_dimension_numbers<[1], [0], [0], [1], [0, 0, 1, 1], [], []>} : vector<8x64xf32>, vector<64x32xf32>, vector<8x32xf32> -> vector<8x32xf32>
    %9 = arith.addf %8, %7 : vector<8x32xf32>
    %c72 = arith.constant 72 : index
    %c0_4 = arith.constant 0 : index
    %10 = vector.load %arg1[%c72, %c0_4] : memref<384x128xf32, #tpu.memory_space<vmem>>, vector<32x32xf32>
    %c136 = arith.constant 136 : index
    %c0_5 = arith.constant 0 : index
    %11 = vector.load %arg1[%c136, %c0_5] : memref<384x128xf32, #tpu.memory_space<vmem>>, vector<32x64xf32>
    %c200 = arith.constant 200 : index
    %c0_6 = arith.constant 0 : index
    %12 = vector.load %arg1[%c200, %c0_6] : memref<384x128xf32, #tpu.memory_space<vmem>>, vector<64x32xf32>
    %c328 = arith.constant 328 : index
    %c0_7 = arith.constant 0 : index
    %13 = vector.load %arg1[%c328, %c0_7] : memref<384x128xf32, #tpu.memory_space<vmem>>, vector<1x32xf32>
    %c329 = arith.constant 329 : index
    %c0_8 = arith.constant 0 : index
    %14 = vector.load %arg1[%c329, %c0_8] : memref<384x128xf32, #tpu.memory_space<vmem>>, vector<1x32xf32>
    %c330 = arith.constant 330 : index
    %c0_9 = arith.constant 0 : index
    %15 = vector.load %arg1[%c330, %c0_9] : memref<384x128xf32, #tpu.memory_space<vmem>>, vector<1x32xf32>
    %c331 = arith.constant 331 : index
    %c0_10 = arith.constant 0 : index
    %16 = vector.load %arg1[%c331, %c0_10] : memref<384x128xf32, #tpu.memory_space<vmem>>, vector<1x64xf32>
    %c332 = arith.constant 332 : index
    %c0_11 = arith.constant 0 : index
    %17 = vector.load %arg1[%c332, %c0_11] : memref<384x128xf32, #tpu.memory_space<vmem>>, vector<1x32xf32>
    %c333 = arith.constant 333 : index
    %c0_12 = arith.constant 0 : index
    %18 = vector.load %arg1[%c333, %c0_12] : memref<384x128xf32, #tpu.memory_space<vmem>>, vector<1x32xf32>
    %c334 = arith.constant 334 : index
    %c0_13 = arith.constant 0 : index
    %19 = vector.load %arg1[%c334, %c0_13] : memref<384x128xf32, #tpu.memory_space<vmem>>, vector<1x32xf32>
    %cst_14 = arith.constant dense<0.000000e+00> : vector<8x32xf32>
    %20 = tpu.matmul %9, %10, %cst_14 {dimension_numbers = #tpu.dot_dimension_numbers<[1], [0], [0], [1], [0, 0, 1, 1], [], []>} : vector<8x32xf32>, vector<32x32xf32>, vector<8x32xf32> -> vector<8x32xf32>
    %21 = vector.broadcast %13 : vector<1x32xf32> to vector<8x32xf32>
    %22 = arith.addf %20, %21 : vector<8x32xf32>
    %23 = arith.addf %9, %22 : vector<8x32xf32>
    %cst_15 = arith.constant dense<0.000000e+00> : vector<8xf32>
    %24 = vector.multi_reduction <add>, %23, %cst_15 [1] : vector<8x32xf32> to vector<8xf32>
    %25 = vector.shape_cast %24 : vector<8xf32> to vector<8x1xf32>
    %cst_16 = arith.constant 3.200000e+01 : f32
    %26 = vector.broadcast %cst_16 : f32 to vector<8x1xf32>
    %27 = arith.divf %25, %26 : vector<8x1xf32>
    %28 = vector.broadcast %27 : vector<8x1xf32> to vector<8x32xf32>
    %29 = arith.subf %23, %28 : vector<8x32xf32>
    %30 = arith.mulf %29, %29 : vector<8x32xf32>
    %cst_17 = arith.constant dense<0.000000e+00> : vector<8xf32>
    %31 = vector.multi_reduction <add>, %30, %cst_17 [1] : vector<8x32xf32> to vector<8xf32>
    %32 = vector.shape_cast %31 : vector<8xf32> to vector<8x1xf32>
    %cst_18 = arith.constant 3.200000e+01 : f32
    %33 = vector.broadcast %cst_18 : f32 to vector<8x1xf32>
    %34 = arith.divf %32, %33 : vector<8x1xf32>
    %35 = vector.broadcast %27 : vector<8x1xf32> to vector<8x32xf32>
    %36 = arith.subf %23, %35 : vector<8x32xf32>
    %cst_19 = arith.constant 9.99999974E-6 : f32
    %37 = vector.broadcast %cst_19 : f32 to vector<8x1xf32>
    %38 = arith.addf %34, %37 : vector<8x1xf32>
    %39 = math.rsqrt %38 : vector<8x1xf32>
    %40 = vector.broadcast %39 : vector<8x1xf32> to vector<8x32xf32>
    %41 = arith.mulf %36, %40 : vector<8x32xf32>
    %42 = vector.broadcast %14 : vector<1x32xf32> to vector<8x32xf32>
    %43 = arith.mulf %41, %42 : vector<8x32xf32>
    %44 = vector.broadcast %15 : vector<1x32xf32> to vector<8x32xf32>
    %45 = arith.addf %43, %44 : vector<8x32xf32>
    %cst_20 = arith.constant dense<0.000000e+00> : vector<8x64xf32>
    %46 = tpu.matmul %45, %11, %cst_20 {dimension_numbers = #tpu.dot_dimension_numbers<[1], [0], [0], [1], [0, 0, 1, 1], [], []>} : vector<8x32xf32>, vector<32x64xf32>, vector<8x64xf32> -> vector<8x64xf32>
    %47 = vector.broadcast %16 : vector<1x64xf32> to vector<8x64xf32>
    %48 = arith.addf %46, %47 : vector<8x64xf32>
    %cst_21 = arith.constant 0.000000e+00 : f32
    %49 = vector.broadcast %cst_21 : f32 to vector<8x64xf32>
    %50 = arith.maximumf %48, %49 : vector<8x64xf32>
    %cst_22 = arith.constant dense<0.000000e+00> : vector<8x32xf32>
    %51 = tpu.matmul %50, %12, %cst_22 {dimension_numbers = #tpu.dot_dimension_numbers<[1], [0], [0], [1], [0, 0, 1, 1], [], []>} : vector<8x64xf32>, vector<64x32xf32>, vector<8x32xf32> -> vector<8x32xf32>
    %52 = vector.broadcast %17 : vector<1x32xf32> to vector<8x32xf32>
    %53 = arith.addf %51, %52 : vector<8x32xf32>
    %54 = arith.addf %45, %53 : vector<8x32xf32>
    %cst_23 = arith.constant dense<0.000000e+00> : vector<8xf32>
    %55 = vector.multi_reduction <add>, %54, %cst_23 [1] : vector<8x32xf32> to vector<8xf32>
    %56 = vector.shape_cast %55 : vector<8xf32> to vector<8x1xf32>
    %cst_24 = arith.constant 3.200000e+01 : f32
    %57 = vector.broadcast %cst_24 : f32 to vector<8x1xf32>
    %58 = arith.divf %56, %57 : vector<8x1xf32>
    %59 = vector.broadcast %58 : vector<8x1xf32> to vector<8x32xf32>
    %60 = arith.subf %54, %59 : vector<8x32xf32>
    %61 = arith.mulf %60, %60 : vector<8x32xf32>
    %cst_25 = arith.constant dense<0.000000e+00> : vector<8xf32>
    %62 = vector.multi_reduction <add>, %61, %cst_25 [1] : vector<8x32xf32> to vector<8xf32>
    %63 = vector.shape_cast %62 : vector<8xf32> to vector<8x1xf32>
    %cst_26 = arith.constant 3.200000e+01 : f32
    %64 = vector.broadcast %cst_26 : f32 to vector<8x1xf32>
    %65 = arith.divf %63, %64 : vector<8x1xf32>
    %66 = vector.broadcast %58 : vector<8x1xf32> to vector<8x32xf32>
    %67 = arith.subf %54, %66 : vector<8x32xf32>
    %cst_27 = arith.constant 9.99999974E-6 : f32
    %68 = vector.broadcast %cst_27 : f32 to vector<8x1xf32>
    %69 = arith.addf %65, %68 : vector<8x1xf32>
    %70 = math.rsqrt %69 : vector<8x1xf32>
    %71 = vector.broadcast %70 : vector<8x1xf32> to vector<8x32xf32>
    %72 = arith.mulf %67, %71 : vector<8x32xf32>
    %73 = vector.broadcast %18 : vector<1x32xf32> to vector<8x32xf32>
    %74 = arith.mulf %72, %73 : vector<8x32xf32>
    %75 = vector.broadcast %19 : vector<1x32xf32> to vector<8x32xf32>
    %76 = arith.addf %74, %75 : vector<8x32xf32>
    %c104 = arith.constant 104 : index
    %c0_28 = arith.constant 0 : index
    %77 = vector.load %arg1[%c104, %c0_28] : memref<384x128xf32, #tpu.memory_space<vmem>>, vector<32x32xf32>
    %c168 = arith.constant 168 : index
    %c0_29 = arith.constant 0 : index
    %78 = vector.load %arg1[%c168, %c0_29] : memref<384x128xf32, #tpu.memory_space<vmem>>, vector<32x64xf32>
    %c264 = arith.constant 264 : index
    %c0_30 = arith.constant 0 : index
    %79 = vector.load %arg1[%c264, %c0_30] : memref<384x128xf32, #tpu.memory_space<vmem>>, vector<64x32xf32>
    %c336 = arith.constant 336 : index
    %c0_31 = arith.constant 0 : index
    %80 = vector.load %arg1[%c336, %c0_31] : memref<384x128xf32, #tpu.memory_space<vmem>>, vector<1x32xf32>
    %c337 = arith.constant 337 : index
    %c0_32 = arith.constant 0 : index
    %81 = vector.load %arg1[%c337, %c0_32] : memref<384x128xf32, #tpu.memory_space<vmem>>, vector<1x32xf32>
    %c338 = arith.constant 338 : index
    %c0_33 = arith.constant 0 : index
    %82 = vector.load %arg1[%c338, %c0_33] : memref<384x128xf32, #tpu.memory_space<vmem>>, vector<1x32xf32>
    %c339 = arith.constant 339 : index
    %c0_34 = arith.constant 0 : index
    %83 = vector.load %arg1[%c339, %c0_34] : memref<384x128xf32, #tpu.memory_space<vmem>>, vector<1x64xf32>
    %c340 = arith.constant 340 : index
    %c0_35 = arith.constant 0 : index
    %84 = vector.load %arg1[%c340, %c0_35] : memref<384x128xf32, #tpu.memory_space<vmem>>, vector<1x32xf32>
    %c341 = arith.constant 341 : index
    %c0_36 = arith.constant 0 : index
    %85 = vector.load %arg1[%c341, %c0_36] : memref<384x128xf32, #tpu.memory_space<vmem>>, vector<1x32xf32>
    %c342 = arith.constant 342 : index
    %c0_37 = arith.constant 0 : index
    %86 = vector.load %arg1[%c342, %c0_37] : memref<384x128xf32, #tpu.memory_space<vmem>>, vector<1x32xf32>
    %cst_38 = arith.constant dense<0.000000e+00> : vector<8x32xf32>
    %87 = tpu.matmul %76, %77, %cst_38 {dimension_numbers = #tpu.dot_dimension_numbers<[1], [0], [0], [1], [0, 0, 1, 1], [], []>} : vector<8x32xf32>, vector<32x32xf32>, vector<8x32xf32> -> vector<8x32xf32>
    %88 = vector.broadcast %80 : vector<1x32xf32> to vector<8x32xf32>
    %89 = arith.addf %87, %88 : vector<8x32xf32>
    %90 = arith.addf %76, %89 : vector<8x32xf32>
    %cst_39 = arith.constant dense<0.000000e+00> : vector<8xf32>
    %91 = vector.multi_reduction <add>, %90, %cst_39 [1] : vector<8x32xf32> to vector<8xf32>
    %92 = vector.shape_cast %91 : vector<8xf32> to vector<8x1xf32>
    %cst_40 = arith.constant 3.200000e+01 : f32
    %93 = vector.broadcast %cst_40 : f32 to vector<8x1xf32>
    %94 = arith.divf %92, %93 : vector<8x1xf32>
    %95 = vector.broadcast %94 : vector<8x1xf32> to vector<8x32xf32>
    %96 = arith.subf %90, %95 : vector<8x32xf32>
    %97 = arith.mulf %96, %96 : vector<8x32xf32>
    %cst_41 = arith.constant dense<0.000000e+00> : vector<8xf32>
    %98 = vector.multi_reduction <add>, %97, %cst_41 [1] : vector<8x32xf32> to vector<8xf32>
    %99 = vector.shape_cast %98 : vector<8xf32> to vector<8x1xf32>
    %cst_42 = arith.constant 3.200000e+01 : f32
    %100 = vector.broadcast %cst_42 : f32 to vector<8x1xf32>
    %101 = arith.divf %99, %100 : vector<8x1xf32>
    %102 = vector.broadcast %94 : vector<8x1xf32> to vector<8x32xf32>
    %103 = arith.subf %90, %102 : vector<8x32xf32>
    %cst_43 = arith.constant 9.99999974E-6 : f32
    %104 = vector.broadcast %cst_43 : f32 to vector<8x1xf32>
    %105 = arith.addf %101, %104 : vector<8x1xf32>
    %106 = math.rsqrt %105 : vector<8x1xf32>
    %107 = vector.broadcast %106 : vector<8x1xf32> to vector<8x32xf32>
    %108 = arith.mulf %103, %107 : vector<8x32xf32>
    %109 = vector.broadcast %81 : vector<1x32xf32> to vector<8x32xf32>
    %110 = arith.mulf %108, %109 : vector<8x32xf32>
    %111 = vector.broadcast %82 : vector<1x32xf32> to vector<8x32xf32>
    %112 = arith.addf %110, %111 : vector<8x32xf32>
    %cst_44 = arith.constant dense<0.000000e+00> : vector<8x64xf32>
    %113 = tpu.matmul %112, %78, %cst_44 {dimension_numbers = #tpu.dot_dimension_numbers<[1], [0], [0], [1], [0, 0, 1, 1], [], []>} : vector<8x32xf32>, vector<32x64xf32>, vector<8x64xf32> -> vector<8x64xf32>
    %114 = vector.broadcast %83 : vector<1x64xf32> to vector<8x64xf32>
    %115 = arith.addf %113, %114 : vector<8x64xf32>
    %cst_45 = arith.constant 0.000000e+00 : f32
    %116 = vector.broadcast %cst_45 : f32 to vector<8x64xf32>
    %117 = arith.maximumf %115, %116 : vector<8x64xf32>
    %cst_46 = arith.constant dense<0.000000e+00> : vector<8x32xf32>
    %118 = tpu.matmul %117, %79, %cst_46 {dimension_numbers = #tpu.dot_dimension_numbers<[1], [0], [0], [1], [0, 0, 1, 1], [], []>} : vector<8x64xf32>, vector<64x32xf32>, vector<8x32xf32> -> vector<8x32xf32>
    %119 = vector.broadcast %84 : vector<1x32xf32> to vector<8x32xf32>
    %120 = arith.addf %118, %119 : vector<8x32xf32>
    %121 = arith.addf %112, %120 : vector<8x32xf32>
    %cst_47 = arith.constant dense<0.000000e+00> : vector<8xf32>
    %122 = vector.multi_reduction <add>, %121, %cst_47 [1] : vector<8x32xf32> to vector<8xf32>
    %123 = vector.shape_cast %122 : vector<8xf32> to vector<8x1xf32>
    %cst_48 = arith.constant 3.200000e+01 : f32
    %124 = vector.broadcast %cst_48 : f32 to vector<8x1xf32>
    %125 = arith.divf %123, %124 : vector<8x1xf32>
    %126 = vector.broadcast %125 : vector<8x1xf32> to vector<8x32xf32>
    %127 = arith.subf %121, %126 : vector<8x32xf32>
    %128 = arith.mulf %127, %127 : vector<8x32xf32>
    %cst_49 = arith.constant dense<0.000000e+00> : vector<8xf32>
    %129 = vector.multi_reduction <add>, %128, %cst_49 [1] : vector<8x32xf32> to vector<8xf32>
    %130 = vector.shape_cast %129 : vector<8xf32> to vector<8x1xf32>
    %cst_50 = arith.constant 3.200000e+01 : f32
    %131 = vector.broadcast %cst_50 : f32 to vector<8x1xf32>
    %132 = arith.divf %130, %131 : vector<8x1xf32>
    %133 = vector.broadcast %125 : vector<8x1xf32> to vector<8x32xf32>
    %134 = arith.subf %121, %133 : vector<8x32xf32>
    %cst_51 = arith.constant 9.99999974E-6 : f32
    %135 = vector.broadcast %cst_51 : f32 to vector<8x1xf32>
    %136 = arith.addf %132, %135 : vector<8x1xf32>
    %137 = math.rsqrt %136 : vector<8x1xf32>
    %138 = vector.broadcast %137 : vector<8x1xf32> to vector<8x32xf32>
    %139 = arith.mulf %134, %138 : vector<8x32xf32>
    %140 = vector.broadcast %85 : vector<1x32xf32> to vector<8x32xf32>
    %141 = arith.mulf %139, %140 : vector<8x32xf32>
    %142 = vector.broadcast %86 : vector<1x32xf32> to vector<8x32xf32>
    %143 = arith.addf %141, %142 : vector<8x32xf32>
    %c344 = arith.constant 344 : index
    %c0_52 = arith.constant 0 : index
    %144 = vector.load %arg1[%c344, %c0_52] : memref<384x128xf32, #tpu.memory_space<vmem>>, vector<32x128xf32>
    %c376 = arith.constant 376 : index
    %c0_53 = arith.constant 0 : index
    %145 = vector.load %arg1[%c376, %c0_53] : memref<384x128xf32, #tpu.memory_space<vmem>>, vector<1x128xf32>
    %cst_54 = arith.constant dense<0.000000e+00> : vector<8x128xf32>
    %146 = tpu.matmul %143, %144, %cst_54 {dimension_numbers = #tpu.dot_dimension_numbers<[1], [0], [0], [1], [0, 0, 1, 1], [], []>} : vector<8x32xf32>, vector<32x128xf32>, vector<8x128xf32> -> vector<8x128xf32>
    %147 = vector.broadcast %145 : vector<1x128xf32> to vector<8x128xf32>
    %148 = arith.addf %146, %147 : vector<8x128xf32>
    %c0_55 = arith.constant 0 : index
    %c0_56 = arith.constant 0 : index
    %149 = vector.load %arg2[%c0_55, %c0_56] : memref<8x128xf32, #tpu.memory_space<vmem>>, vector<8x128xf32>
    tpu.vector_store %arg2[%c0_55, %c0_56], %148 {strides = array<i32>} : memref<8x128xf32, #tpu.memory_space<vmem>>, vector<8x128xf32>,
    return
  }
}

</mosaic_0001>

<llo_original>
// kernel: tpu_custom_call.1
$region0: #{tpu_custom_call.1}
  #allocation0 [shape = 'u32[]', space=smem, size = 0x4, offset = 0x4, fixed_abs, tag = 'smem constant byte address 0x4 - core index']
  #allocation1 [shape = 'u32[144,128]{1,0:T(1,128)}', space=vmem, size = 0x12000, scoped, tag = 'internal scratch']
  %s0 = inlined_call_operand.vmem [shape: s32[8,1], index: 0, kind: input, shape index: {}]
  %s1 = inlined_call_operand.hbm [shape: f32[384,128], index: 1, kind: input, shape index: {}]
  %s2 = inlined_call_operand.hbm [shape: f32[8,128], index: 2, kind: output, shape index: {}]
  %s3 = sld [smem:[#allocation0]]
  $region22: #{tpu_custom_call.1} parent=0
    _
  %s5 = ssub.s32 1, %s3
  %s6 = scalar_select 0, %s5, %s3
  $region1: #{tpu_custom_call.1} parent=0
    #allocation2 [shape = 'u8[196608]{0}', space=vmem, size = 0x30000, scoped, tag = 'input window, operand 1, single buffered']
    #allocation3 [shape = 's32[1]{0}', space=sflag, size = 0x4, scoped, tag = 'scoped memory for tpu_custom_call.1']
    #allocation4 [shape = 's32[1]{0}', space=sflag, size = 0x4, scoped, tag = 'scoped memory for tpu_custom_call.1']
    #allocation5 [shape = 'u8[4096]{0}', space=vmem, size = 0x1000, scoped, tag = 'output window, operand 0, single buffered']
    %7 = vsyncpa [#allocation3], 0
    %8 = vsyncpa [#allocation4], 0
    // Predicated region
    $region2: #{tpu_custom_call.1} parent=1 // pred_check
      _
    $region3: #{tpu_custom_call.1} parent=1 // pred_check_branch
      %10 = sbr.rel (0) target = $region5
    $region4: #{tpu_custom_call.1} parent=1 // pred_region
      _
    $region5: #{tpu_custom_call.1} parent=1 // pred_fallthru
      _
    // Predicated region
    $region6: #{tpu_custom_call.1} parent=1 // pred_check
      _
    $region7: #{tpu_custom_call.1} parent=1 // pred_check_branch
      %12 = sbr.rel (0) target = $region9
    $region8: #{tpu_custom_call.1} parent=1 // pred_region
      %s14 = ssub.s32 6144, 6144
      %15 = vsyncadd [#allocation3], %s14
      %s16 = sshll.u32 [#allocation2], 4
      %s17 = int_to_ptr.vmem [resolvable:$true] %s16
      %22 = dma.hbm_to_vmem [thread:$0]  %s1, 6144, %s17, [#allocation3], 128, 128, 8
    $region9: #{tpu_custom_call.1} parent=1 // pred_fallthru
      _
    // Predicated region
    $region10: #{tpu_custom_call.1} parent=1 // pred_check
      _
    $region11: #{tpu_custom_call.1} parent=1 // pred_check_branch
      %24 = sbr.rel (0) target = $region13
    $region12: #{tpu_custom_call.1} parent=1 // pred_region
      %25 = dma.done [#allocation3], 6144
    $region13: #{tpu_custom_call.1} parent=1 // pred_fallthru
      _
    %v26 = vld [vmem:[%s0] sm:$0xff]
    %v27 = vlaneseq
    %v28 = vand.u32 %v27, 127
    %29 = vset.pattern.permute.xlu0 0
    %30 = vperm.xlu0 %29, %v26
    %v31 = vpop.permute.xlu0 %30
    %vm32 = vcmp.eq.s32.totalorder %v28, %v31
    %v33 = vsel %vm32, 1, 0
    %v34 = vcvt.s32.f32 %v33
    %v35 = vld [vmem:[#allocation2] sm:$0xff]
    %v36 = vld [vmem:[#allocation2 + $0x8] sm:$0xff]
    %v37 = vld [vmem:[#allocation2 + $0x10] sm:$0xff]
    %v38 = vld [vmem:[#allocation2 + $0x18] sm:$0xff]
    %v39 = vld [vmem:[#allocation2 + $0x20] sm:$0xff]
    %v40 = vld [vmem:[#allocation2 + $0x28] sm:$0xff]
    %v41 = vld [vmem:[#allocation2 + $0x30] sm:$0xff]
    %v42 = vld [vmem:[#allocation2 + $0x38] sm:$0xff]
    %v43 = vld [vmem:[#allocation2 + $0x40] sm:$0xff]
    %vm44 = vcmask 523264
    %v46 = vsel %vm44, %v34, 0
    %48 = vmatprep.subr.mxu0 0.0
    %49 = vmatpush1.msra.mxu0 %v35
    %50 = vmatprep.subr.mxu0 0.0
    %51 = vmatpush1.msra.mxu0 %v36
    %52 = vmatprep.subr.mxu0 0.0
    %53 = vmatpush1.msra.mxu0 %v37
    %54 = vmatprep.subr.mxu0 0.0
    %55 = vmatpush1.msra.mxu0 %v38
    %56 = vmatprep.subr.mxu0 0.0
    %57 = vmatpush1.msra.mxu0 %v39
    %58 = vmatprep.subr.mxu0 0.0
    %59 = vmatpush1.msra.mxu0 %v40
    %60 = vmatprep.subr.mxu0 0.0
    %61 = vmatpush1.msra.mxu0 %v41
    %62 = vmatprep.subr.mxu0 0.0
    %63 = vmatpush1.msra.mxu0 %v42
    %64 = vmatprep.subr.mxu0 0.0
    %65 = vmatpush1.msra.mxu0 0.0
    %66 = vmatprep.subr.mxu0 0.0
    %67 = vmatpush1.msra.mxu0 0.0
    %68 = vmatprep.subr.mxu0 0.0
    %69 = vmatpush1.msra.mxu0 0.0
    %70 = vmatprep.subr.mxu0 0.0
    %71 = vmatpush1.msra.mxu0 0.0
    %72 = vmatprep.subr.mxu0 0.0
    %73 = vmatpush1.msra.mxu0 0.0
    %74 = vmatprep.subr.mxu0 0.0
    %75 = vmatpush1.msra.mxu0 0.0
    %76 = vmatprep.subr.mxu0 0.0
    %77 = vmatpush1.msra.mxu0 0.0
    %78 = vmatprep.subr.mxu0 0.0
    %79 = vmatpush1.msra.mxu0 0.0
    %80 = vmatprep.subr.mxu0 0.0
    %81 = vmatpush1.msra.mxu0 0.0
    %82 = vmatprep.subr.mxu0 0.0
    %83 = vmatpush1.msra.mxu0 0.0
    %84 = vmatprep.subr.mxu0 0.0
    %85 = vmatpush1.msra.mxu0 0.0
    %86 = vmatprep.subr.mxu0 0.0
    %87 = vmatpush1.msra.mxu0 0.0
    %88 = vmatprep.subr.mxu0 0.0
    %89 = vmatpush1.msra.mxu0 0.0
    %90 = vmatprep.subr.mxu0 0.0
    %91 = vmatpush1.msra.mxu0 0.0
    %92 = vmatprep.subr.mxu0 0.0
    %93 = vmatpush1.msra.mxu0 0.0
    %94 = vmatprep.subr.mxu0 0.0
    %95 = vmatpush1.msra.mxu0 0.0
    %96 = vmatprep.subr.mxu0 0.0
    %97 = vmatpush1.msra.mxu0 0.0
    %98 = vmatprep.subr.mxu0 0.0
    %99 = vmatpush1.msra.mxu0 0.0
    %100 = vmatprep.subr.mxu0 0.0
    %101 = vmatpush1.msra.mxu0 0.0
    %102 = vmatprep.subr.mxu0 0.0
    %103 = vmatpush1.msra.mxu0 0.0
    %104 = vmatprep.subr.mxu0 0.0
    %105 = vmatpush1.msra.mxu0 0.0
    %106 = vmatprep.subr.mxu0 0.0
    %107 = vmatpush1.msra.mxu0 0.0
    %108 = vmatprep.subr.mxu0 0.0
    %109 = vmatpush1.msra.mxu0 0.0
    %110 = vmatprep.subr.mxu0 0.0
    %111 = vmatpush1.msra.mxu0 0.0
    %112 = vmatprep.mubr.f32.mxu0 0.0
    %113 = vmatmul.mubr.f32.gmra.mrb[0].mxu0 %v46
    %v114 = vpop.f32.mrb[0].mxu0
    %v115 = vadd.f32 %v43, %v114
    %v116 = vpop.f32.mrb[0].mxu0
    %117 = vdwg.mxu0
    %v118 = vld [vmem:[#allocation2 + $0x48] sm:$0xff]
    %v119 = vld [vmem:[#allocation2 + $0x50] sm:$0xff]
    %v120 = vld [vmem:[#allocation2 + $0x58] sm:$0xff]
    %v121 = vld [vmem:[#allocation2 + $0x60] sm:$0xff]
    %v122 = vld [vmem:[#allocation2 + $0x88] sm:$0xff]
    %v123 = vld [vmem:[#allocation2 + $0x90] sm:$0xff]
    %v124 = vld [vmem:[#allocation2 + $0x98] sm:$0xff]
    %v125 = vld [vmem:[#allocation2 + $0xa0] sm:$0xff]
    %v126 = vld [vmem:[#allocation2 + $0xc8] sm:$0xff]
    %v127 = vld [vmem:[#allocation2 + $0xd0] sm:$0xff]
    %v128 = vld [vmem:[#allocation2 + $0xd8] sm:$0xff]
    %v129 = vld [vmem:[#allocation2 + $0xe0] sm:$0xff]
    %v130 = vld [vmem:[#allocation2 + $0xe8] sm:$0xff]
    %v131 = vld [vmem:[#allocation2 + $0xf0] sm:$0xff]
    %v132 = vld [vmem:[#allocation2 + $0xf8] sm:$0xff]
    %v133 = vld [vmem:[#allocation2 + $0x100] sm:$0xff]
    %v134 = vld [vmem:[#allocation2 + $0x148] sm:$0x1]
    %v135 = vld [vmem:[#allocation2 + $0x149] sm:$0x1]
    %v136 = vld [vmem:[#allocation2 + $0x14a] sm:$0x1]
    %v137 = vld [vmem:[#allocation2 + $0x14b] sm:$0x1]
    %v138 = vld [vmem:[#allocation2 + $0x14c] sm:$0x1]
    %v139 = vld [vmem:[#allocation2 + $0x14d] sm:$0x1]
    %v140 = vld [vmem:[#allocation2 + $0x14e] sm:$0x1]
    %v141 = vlaneseq
    %v142 = vshrl.u32 %v141, 7
    %v143 = vsub.s32 0, %v142
    %v144 = vrot.slane %v134, %v143
    %vm145 = vcmask 261120
    %v147 = vsel %vm145, %v115, 0
    %149 = vmatprep.subr.mxu0 0.0
    %150 = vmatpush1.msra.mxu0 %v118
    %151 = vmatprep.subr.mxu0 0.0
    %152 = vmatpush1.msra.mxu0 %v119
    %153 = vmatprep.subr.mxu0 0.0
    %154 = vmatpush1.msra.mxu0 %v120
    %155 = vmatprep.subr.mxu0 0.0
    %156 = vmatpush1.msra.mxu0 %v121
    %157 = vmatprep.subr.mxu0 0.0
    %158 = vmatpush1.msra.mxu0 0.0
    %159 = vmatprep.subr.mxu0 0.0
    %160 = vmatpush1.msra.mxu0 0.0
    %161 = vmatprep.subr.mxu0 0.0
    %162 = vmatpush1.msra.mxu0 0.0
    %163 = vmatprep.subr.mxu0 0.0
    %164 = vmatpush1.msra.mxu0 0.0
    %165 = vmatprep.subr.mxu0 0.0
    %166 = vmatpush1.msra.mxu0 0.0
    %167 = vmatprep.subr.mxu0 0.0
    %168 = vmatpush1.msra.mxu0 0.0
    %169 = vmatprep.subr.mxu0 0.0
    %170 = vmatpush1.msra.mxu0 0.0
    %171 = vmatprep.subr.mxu0 0.0
    %172 = vmatpush1.msra.mxu0 0.0
    %173 = vmatprep.subr.mxu0 0.0
    %174 = vmatpush1.msra.mxu0 0.0
    %175 = vmatprep.subr.mxu0 0.0
    %176 = vmatpush1.msra.mxu0 0.0
    %177 = vmatprep.subr.mxu0 0.0
    %178 = vmatpush1.msra.mxu0 0.0
    %179 = vmatprep.subr.mxu0 0.0
    %180 = vmatpush1.msra.mxu0 0.0
    %181 = vmatprep.subr.mxu0 0.0
    %182 = vmatpush1.msra.mxu0 0.0
    %183 = vmatprep.subr.mxu0 0.0
    %184 = vmatpush1.msra.mxu0 0.0
    %185 = vmatprep.subr.mxu0 0.0
    %186 = vmatpush1.msra.mxu0 0.0
    %187 = vmatprep.subr.mxu0 0.0
    %188 = vmatpush1.msra.mxu0 0.0
    %189 = vmatprep.subr.mxu0 0.0
    %190 = vmatpush1.msra.mxu0 0.0
    %191 = vmatprep.subr.mxu0 0.0
    %192 = vmatpush1.msra.mxu0 0.0
    %193 = vmatprep.subr.mxu0 0.0
    %194 = vmatpush1.msra.mxu0 0.0
    %195 = vmatprep.subr.mxu0 0.0
    %196 = vmatpush1.msra.mxu0 0.0
    %197 = vmatprep.subr.mxu0 0.0
    %198 = vmatpush1.msra.mxu0 0.0
    %199 = vmatprep.subr.mxu0 0.0
    %200 = vmatpush1.msra.mxu0 0.0
    %201 = vmatprep.subr.mxu0 0.0
    %202 = vmatpush1.msra.mxu0 0.0
    %203 = vmatprep.subr.mxu0 0.0
    %204 = vmatpush1.msra.mxu0 0.0
    %205 = vmatprep.subr.mxu0 0.0
    %206 = vmatpush1.msra.mxu0 0.0
    %207 = vmatprep.subr.mxu0 0.0
    %208 = vmatpush1.msra.mxu0 0.0
    %209 = vmatprep.subr.mxu0 0.0
    %210 = vmatpush1.msra.mxu0 0.0
    %211 = vmatprep.subr.mxu0 0.0
    %212 = vmatpush1.msra.mxu0 0.0
    %213 = vmatprep.mubr.f32.mxu0 0.0
    %214 = vmatmul.mubr.f32.gmra.mrb[0].mxu0 %v147
    %v215 = vpop.f32.mrb[0].mxu0
    %v216 = vadd.f32 %v144, %v215
    %v217 = vpop.f32.mrb[0].mxu0
    %218 = vdwg.mxu0
    %v219 = vadd.f32 %v115, %v216
    %v220 = vsel %vm145, %v219, 0.0
    %221 = vadd.xlane.f32.xlu0 %v220
    %v222 = vpop.xlane.xlu0 %221
    %v223 = vrcp.pop 32.0
    %v224 = vmul.f32 %v222, %v223
    %v225 = vsub.f32 %v219, %v224
    %v226 = vmul.f32 %v225, %v225
    %v227 = vsel %vm145, %v226, 0.0
    %228 = vadd.xlane.f32.xlu0 %v227
    %v229 = vpop.xlane.xlu0 %228
    %v230 = vmul.f32 %v229, %v223
    %v231 = vadd.f32 %v230, 1e-05
    %v232 = vrsqrt.pop %v231
    %v233 = vmul.f32 %v225, %v232
    %v234 = vlaneseq
    %v235 = vshrl.u32 %v234, 7
    %v236 = vsub.s32 0, %v235
    %v237 = vrot.slane %v135, %v236
    %v238 = vmul.f32 %v233, %v237
    %v239 = vlaneseq
    %v240 = vshrl.u32 %v239, 7
    %v241 = vsub.s32 0, %v240
    %v242 = vrot.slane %v136, %v241
    %v243 = vadd.f32 %v238, %v242
    %v244 = vlaneseq
    %v245 = vshrl.u32 %v244, 7
    %v246 = vsub.s32 0, %v245
    %v247 = vrot.slane %v137, %v246
    %v249 = vsel %vm145, %v243, 0
    %251 = vmatprep.subr.mxu0 0.0
    %252 = vmatpush1.msra.mxu0 %v122
    %253 = vmatprep.subr.mxu0 0.0
    %254 = vmatpush1.msra.mxu0 %v123
    %255 = vmatprep.subr.mxu0 0.0
    %256 = vmatpush1.msra.mxu0 %v124
    %257 = vmatprep.subr.mxu0 0.0
    %258 = vmatpush1.msra.mxu0 %v125
    %259 = vmatprep.subr.mxu0 0.0
    %260 = vmatpush1.msra.mxu0 0.0
    %261 = vmatprep.subr.mxu0 0.0
    %262 = vmatpush1.msra.mxu0 0.0
    %263 = vmatprep.subr.mxu0 0.0
    %264 = vmatpush1.msra.mxu0 0.0
    %265 = vmatprep.subr.mxu0 0.0
    %266 = vmatpush1.msra.mxu0 0.0
    %267 = vmatprep.subr.mxu0 0.0
    %268 = vmatpush1.msra.mxu0 0.0
    %269 = vmatprep.subr.mxu0 0.0
    %270 = vmatpush1.msra.mxu0 0.0
    %271 = vmatprep.subr.mxu0 0.0
    %272 = vmatpush1.msra.mxu0 0.0
    %273 = vmatprep.subr.mxu0 0.0
    %274 = vmatpush1.msra.mxu0 0.0
    %275 = vmatprep.subr.mxu0 0.0
    %276 = vmatpush1.msra.mxu0 0.0
    %277 = vmatprep.subr.mxu0 0.0
    %278 = vmatpush1.msra.mxu0 0.0
    %279 = vmatprep.subr.mxu0 0.0
    %280 = vmatpush1.msra.mxu0 0.0
    %281 = vmatprep.subr.mxu0 0.0
    %282 = vmatpush1.msra.mxu0 0.0
    %283 = vmatprep.subr.mxu0 0.0
    %284 = vmatpush1.msra.mxu0 0.0
    %285 = vmatprep.subr.mxu0 0.0
    %286 = vmatpush1.msra.mxu0 0.0
    %287 = vmatprep.subr.mxu0 0.0
    %288 = vmatpush1.msra.mxu0 0.0
    %289 = vmatprep.subr.mxu0 0.0
    %290 = vmatpush1.msra.mxu0 0.0
    %291 = vmatprep.subr.mxu0 0.0
    %292 = vmatpush1.msra.mxu0 0.0
    %293 = vmatprep.subr.mxu0 0.0
    %294 = vmatpush1.msra.mxu0 0.0
    %295 = vmatprep.subr.mxu0 0.0
    %296 = vmatpush1.msra.mxu0 0.0
    %297 = vmatprep.subr.mxu0 0.0
    %298 = vmatpush1.msra.mxu0 0.0
    %299 = vmatprep.subr.mxu0 0.0
    %300 = vmatpush1.msra.mxu0 0.0
    %301 = vmatprep.subr.mxu0 0.0
    %302 = vmatpush1.msra.mxu0 0.0
    %303 = vmatprep.subr.mxu0 0.0
    %304 = vmatpush1.msra.mxu0 0.0
    %305 = vmatprep.subr.mxu0 0.0
    %306 = vmatpush1.msra.mxu0 0.0
    %307 = vmatprep.subr.mxu0 0.0
    %308 = vmatpush1.msra.mxu0 0.0
    %309 = vmatprep.subr.mxu0 0.0
    %310 = vmatpush1.msra.mxu0 0.0
    %311 = vmatprep.subr.mxu0 0.0
    %312 = vmatpush1.msra.mxu0 0.0
    %313 = vmatprep.subr.mxu0 0.0
    %314 = vmatpush1.msra.mxu0 0.0
    %315 = vmatprep.mubr.f32.mxu0 0.0
    %316 = vmatmul.mubr.f32.gmra.mrb[0].mxu0 %v249
    %v317 = vpop.f32.mrb[0].mxu0
    %v318 = vadd.f32 %v247, %v317
    %v319 = vpop.f32.mrb[0].mxu0
    %320 = vdwg.mxu0
    %v321 = vmax.f32 %v318, 0.0
    %v322 = vlaneseq
    %v323 = vshrl.u32 %v322, 7
    %v324 = vsub.s32 0, %v323
    %v325 = vrot.slane %v138, %v324
    %v327 = vsel %vm44, %v321, 0
    %329 = vmatprep.subr.mxu0 0.0
    %330 = vmatpush1.msra.mxu0 %v126
    %331 = vmatprep.subr.mxu0 0.0
    %332 = vmatpush1.msra.mxu0 %v127
    %333 = vmatprep.subr.mxu0 0.0
    %334 = vmatpush1.msra.mxu0 %v128
    %335 = vmatprep.subr.mxu0 0.0
    %336 = vmatpush1.msra.mxu0 %v129
    %337 = vmatprep.subr.mxu0 0.0
    %338 = vmatpush1.msra.mxu0 %v130
    %339 = vmatprep.subr.mxu0 0.0
    %340 = vmatpush1.msra.mxu0 %v131
    %341 = vmatprep.subr.mxu0 0.0
    %342 = vmatpush1.msra.mxu0 %v132
    %343 = vmatprep.subr.mxu0 0.0
    %344 = vmatpush1.msra.mxu0 %v133
    %345 = vmatprep.subr.mxu0 0.0
    %346 = vmatpush1.msra.mxu0 0.0
    %347 = vmatprep.subr.mxu0 0.0
    %348 = vmatpush1.msra.mxu0 0.0
    %349 = vmatprep.subr.mxu0 0.0
    %350 = vmatpush1.msra.mxu0 0.0
    %351 = vmatprep.subr.mxu0 0.0
    %352 = vmatpush1.msra.mxu0 0.0
    %353 = vmatprep.subr.mxu0 0.0
    %354 = vmatpush1.msra.mxu0 0.0
    %355 = vmatprep.subr.mxu0 0.0
    %356 = vmatpush1.msra.mxu0 0.0
    %357 = vmatprep.subr.mxu0 0.0
    %358 = vmatpush1.msra.mxu0 0.0
    %359 = vmatprep.subr.mxu0 0.0
    %360 = vmatpush1.msra.mxu0 0.0
    %361 = vmatprep.subr.mxu0 0.0
    %362 = vmatpush1.msra.mxu0 0.0
    %363 = vmatprep.subr.mxu0 0.0
    %364 = vmatpush1.msra.mxu0 0.0
    %365 = vmatprep.subr.mxu0 0.0
    %366 = vmatpush1.msra.mxu0 0.0
    %367 = vmatprep.subr.mxu0 0.0
    %368 = vmatpush1.msra.mxu0 0.0
    %369 = vmatprep.subr.mxu0 0.0
    %370 = vmatpush1.msra.mxu0 0.0
    %371 = vmatprep.subr.mxu0 0.0
    %372 = vmatpush1.msra.mxu0 0.0
    %373 = vmatprep.subr.mxu0 0.0
    %374 = vmatpush1.msra.mxu0 0.0
    %375 = vmatprep.subr.mxu0 0.0
    %376 = vmatpush1.msra.mxu0 0.0
    %377 = vmatprep.subr.mxu0 0.0
    %378 = vmatpush1.msra.mxu0 0.0
    %379 = vmatprep.subr.mxu0 0.0
    %380 = vmatpush1.msra.mxu0 0.0
    %381 = vmatprep.subr.mxu0 0.0
    %382 = vmatpush1.msra.mxu0 0.0
    %383 = vmatprep.subr.mxu0 0.0
    %384 = vmatpush1.msra.mxu0 0.0
    %385 = vmatprep.subr.mxu0 0.0
    %386 = vmatpush1.msra.mxu0 0.0
    %387 = vmatprep.subr.mxu0 0.0
    %388 = vmatpush1.msra.mxu0 0.0
    %389 = vmatprep.subr.mxu0 0.0
    %390 = vmatpush1.msra.mxu0 0.0
    %391 = vmatprep.subr.mxu0 0.0
    %392 = vmatpush1.msra.mxu0 0.0
    %393 = vmatprep.mubr.f32.mxu0 0.0
    %394 = vmatmul.mubr.f32.gmra.mrb[0].mxu0 %v327
    %v395 = vpop.f32.mrb[0].mxu0
    %v396 = vadd.f32 %v325, %v395
    %v397 = vpop.f32.mrb[0].mxu0
    %398 = vdwg.mxu0
    %v399 = vadd.f32 %v243, %v396
    %v400 = vsel %vm145, %v399, 0.0
    %401 = vadd.xlane.f32.xlu0 %v400
    %v402 = vpop.xlane.xlu0 %401
    %v403 = vmul.f32 %v402, %v223
    %v404 = vsub.f32 %v399, %v403
    %v405 = vmul.f32 %v404, %v404
    %v406 = vsel %vm145, %v405, 0.0
    %407 = vadd.xlane.f32.xlu0 %v406
    %v408 = vpop.xlane.xlu0 %407
    %v409 = vmul.f32 %v408, %v223
    %v410 = vadd.f32 %v409, 1e-05
    %v411 = vrsqrt.pop %v410
    %v412 = vmul.f32 %v404, %v411
    %v413 = vlaneseq
    %v414 = vshrl.u32 %v413, 7
    %v415 = vsub.s32 0, %v414
    %v416 = vrot.slane %v139, %v415
    %v417 = vmul.f32 %v412, %v416
    %v418 = vlaneseq
    %v419 = vshrl.u32 %v418, 7
    %v420 = vsub.s32 0, %v419
    %v421 = vrot.slane %v140, %v420
    %v422 = vadd.f32 %v417, %v421
    %v423 = vld [vmem:[#allocation2 + $0x68] sm:$0xff]
    %v424 = vld [vmem:[#allocation2 + $0x70] sm:$0xff]
    %v425 = vld [vmem:[#allocation2 + $0x78] sm:$0xff]
    %v426 = vld [vmem:[#allocation2 + $0x80] sm:$0xff]
    %v427 = vld [vmem:[#allocation2 + $0xa8] sm:$0xff]
    %v428 = vld [vmem:[#allocation2 + $0xb0] sm:$0xff]
    %v429 = vld [vmem:[#allocation2 + $0xb8] sm:$0xff]
    %v430 = vld [vmem:[#allocation2 + $0xc0] sm:$0xff]
    %v431 = vld [vmem:[#allocation2 + $0x108] sm:$0xff]
    %v432 = vld [vmem:[#allocation2 + $0x110] sm:$0xff]
    %v433 = vld [vmem:[#allocation2 + $0x118] sm:$0xff]
    %v434 = vld [vmem:[#allocation2 + $0x120] sm:$0xff]
    %v435 = vld [vmem:[#allocation2 + $0x128] sm:$0xff]
    %v436 = vld [vmem:[#allocation2 + $0x130] sm:$0xff]
    %v437 = vld [vmem:[#allocation2 + $0x138] sm:$0xff]
    %v438 = vld [vmem:[#allocation2 + $0x140] sm:$0xff]
    %v439 = vld [vmem:[#allocation2 + $0x150] sm:$0x1]
    %v440 = vld [vmem:[#allocation2 + $0x151] sm:$0x1]
    %v441 = vld [vmem:[#allocation2 + $0x152] sm:$0x1]
    %v442 = vld [vmem:[#allocation2 + $0x153] sm:$0x1]
    %v443 = vld [vmem:[#allocation2 + $0x154] sm:$0x1]
    %v444 = vld [vmem:[#allocation2 + $0x155] sm:$0x1]
    %v445 = vld [vmem:[#allocation2 + $0x156] sm:$0x1]
    %v446 = vlaneseq
    %v447 = vshrl.u32 %v446, 7
    %v448 = vsub.s32 0, %v447
    %v449 = vrot.slane %v439, %v448
    %v451 = vsel %vm145, %v422, 0
    %453 = vmatprep.subr.mxu0 0.0
    %454 = vmatpush1.msra.mxu0 %v423
    %455 = vmatprep.subr.mxu0 0.0
    %456 = vmatpush1.msra.mxu0 %v424
    %457 = vmatprep.subr.mxu0 0.0
    %458 = vmatpush1.msra.mxu0 %v425
    %459 = vmatprep.subr.mxu0 0.0
    %460 = vmatpush1.msra.mxu0 %v426
    %461 = vmatprep.subr.mxu0 0.0
    %462 = vmatpush1.msra.mxu0 0.0
    %463 = vmatprep.subr.mxu0 0.0
    %464 = vmatpush1.msra.mxu0 0.0
    %465 = vmatprep.subr.mxu0 0.0
    %466 = vmatpush1.msra.mxu0 0.0
    %467 = vmatprep.subr.mxu0 0.0
    %468 = vmatpush1.msra.mxu0 0.0
    %469 = vmatprep.subr.mxu0 0.0
    %470 = vmatpush1.msra.mxu0 0.0
    %471 = vmatprep.subr.mxu0 0.0
    %472 = vmatpush1.msra.mxu0 0.0
    %473 = vmatprep.subr.mxu0 0.0
    %474 = vmatpush1.msra.mxu0 0.0
    %475 = vmatprep.subr.mxu0 0.0
    %476 = vmatpush1.msra.mxu0 0.0
    %477 = vmatprep.subr.mxu0 0.0
    %478 = vmatpush1.msra.mxu0 0.0
    %479 = vmatprep.subr.mxu0 0.0
    %480 = vmatpush1.msra.mxu0 0.0
    %481 = vmatprep.subr.mxu0 0.0
    %482 = vmatpush1.msra.mxu0 0.0
    %483 = vmatprep.subr.mxu0 0.0
    %484 = vmatpush1.msra.mxu0 0.0
    %485 = vmatprep.subr.mxu0 0.0
    %486 = vmatpush1.msra.mxu0 0.0
    %487 = vmatprep.subr.mxu0 0.0
    %488 = vmatpush1.msra.mxu0 0.0
    %489 = vmatprep.subr.mxu0 0.0
    %490 = vmatpush1.msra.mxu0 0.0
    %491 = vmatprep.subr.mxu0 0.0
    %492 = vmatpush1.msra.mxu0 0.0
    %493 = vmatprep.subr.mxu0 0.0
    %494 = vmatpush1.msra.mxu0 0.0
    %495 = vmatprep.subr.mxu0 0.0
    %496 = vmatpush1.msra.mxu0 0.0
    %497 = vmatprep.subr.mxu0 0.0
    %498 = vmatpush1.msra.mxu0 0.0
    %499 = vmatprep.subr.mxu0 0.0
    %500 = vmatpush1.msra.mxu0 0.0
    %501 = vmatprep.subr.mxu0 0.0
    %502 = vmatpush1.msra.mxu0 0.0
    %503 = vmatprep.subr.mxu0 0.0
    %504 = vmatpush1.msra.mxu0 0.0
    %505 = vmatprep.subr.mxu0 0.0
    %506 = vmatpush1.msra.mxu0 0.0
    %507 = vmatprep.subr.mxu0 0.0
    %508 = vmatpush1.msra.mxu0 0.0
    %509 = vmatprep.subr.mxu0 0.0
    %510 = vmatpush1.msra.mxu0 0.0
    %511 = vmatprep.subr.mxu0 0.0
    %512 = vmatpush1.msra.mxu0 0.0
    %513 = vmatprep.subr.mxu0 0.0
    %514 = vmatpush1.msra.mxu0 0.0
    %515 = vmatprep.subr.mxu0 0.0
    %516 = vmatpush1.msra.mxu0 0.0
    %517 = vmatprep.mubr.f32.mxu0 0.0
    %518 = vmatmul.mubr.f32.gmra.mrb[0].mxu0 %v451
    %v519 = vpop.f32.mrb[0].mxu0
    %v520 = vadd.f32 %v449, %v519
    %v521 = vpop.f32.mrb[0].mxu0
    %522 = vdwg.mxu0
    %v523 = vadd.f32 %v422, %v520
    %v524 = vsel %vm145, %v523, 0.0
    %525 = vadd.xlane.f32.xlu0 %v524
    %v526 = vpop.xlane.xlu0 %525
    %v527 = vmul.f32 %v526, %v223
    %v528 = vsub.f32 %v523, %v527
    %v529 = vmul.f32 %v528, %v528
    %v530 = vsel %vm145, %v529, 0.0
    %531 = vadd.xlane.f32.xlu0 %v530
    %v532 = vpop.xlane.xlu0 %531
    %v533 = vmul.f32 %v532, %v223
    %v534 = vadd.f32 %v533, 1e-05
    %v535 = vrsqrt.pop %v534
    %v536 = vmul.f32 %v528, %v535
    %v537 = vlaneseq
    %v538 = vshrl.u32 %v537, 7
    %v539 = vsub.s32 0, %v538
    %v540 = vrot.slane %v440, %v539
    %v541 = vmul.f32 %v536, %v540
    %v542 = vlaneseq
    %v543 = vshrl.u32 %v542, 7
    %v544 = vsub.s32 0, %v543
    %v545 = vrot.slane %v441, %v544
    %v546 = vadd.f32 %v541, %v545
    %v547 = vlaneseq
    %v548 = vshrl.u32 %v547, 7
    %v549 = vsub.s32 0, %v548
    %v550 = vrot.slane %v442, %v549
    %v552 = vsel %vm145, %v546, 0
    %554 = vmatprep.subr.mxu0 0.0
    %555 = vmatpush1.msra.mxu0 %v427
    %556 = vmatprep.subr.mxu0 0.0
    %557 = vmatpush1.msra.mxu0 %v428
    %558 = vmatprep.subr.mxu0 0.0
    %559 = vmatpush1.msra.mxu0 %v429
    %560 = vmatprep.subr.mxu0 0.0
    %561 = vmatpush1.msra.mxu0 %v430
    %562 = vmatprep.subr.mxu0 0.0
    %563 = vmatpush1.msra.mxu0 0.0
    %564 = vmatprep.subr.mxu0 0.0
    %565 = vmatpush1.msra.mxu0 0.0
    %566 = vmatprep.subr.mxu0 0.0
    %567 = vmatpush1.msra.mxu0 0.0
    %568 = vmatprep.subr.mxu0 0.0
    %569 = vmatpush1.msra.mxu0 0.0
    %570 = vmatprep.subr.mxu0 0.0
    %571 = vmatpush1.msra.mxu0 0.0
    %572 = vmatprep.subr.mxu0 0.0
    %573 = vmatpush1.msra.mxu0 0.0
    %574 = vmatprep.subr.mxu0 0.0
    %575 = vmatpush1.msra.mxu0 0.0
    %576 = vmatprep.subr.mxu0 0.0
    %577 = vmatpush1.msra.mxu0 0.0
    %578 = vmatprep.subr.mxu0 0.0
    %579 = vmatpush1.msra.mxu0 0.0
    %580 = vmatprep.subr.mxu0 0.0
    %581 = vmatpush1.msra.mxu0 0.0
    %582 = vmatprep.subr.mxu0 0.0
    %583 = vmatpush1.msra.mxu0 0.0
    %584 = vmatprep.subr.mxu0 0.0
    %585 = vmatpush1.msra.mxu0 0.0
    %586 = vmatprep.subr.mxu0 0.0
    %587 = vmatpush1.msra.mxu0 0.0
    %588 = vmatprep.subr.mxu0 0.0
    %589 = vmatpush1.msra.mxu0 0.0
    %590 = vmatprep.subr.mxu0 0.0
    %591 = vmatpush1.msra.mxu0 0.0
    %592 = vmatprep.subr.mxu0 0.0
    %593 = vmatpush1.msra.mxu0 0.0
    %594 = vmatprep.subr.mxu0 0.0
    %595 = vmatpush1.msra.mxu0 0.0
    %596 = vmatprep.subr.mxu0 0.0
    %597 = vmatpush1.msra.mxu0 0.0
    %598 = vmatprep.subr.mxu0 0.0
    %599 = vmatpush1.msra.mxu0 0.0
    %600 = vmatprep.subr.mxu0 0.0
    %601 = vmatpush1.msra.mxu0 0.0
    %602 = vmatprep.subr.mxu0 0.0
    %603 = vmatpush1.msra.mxu0 0.0
    %604 = vmatprep.subr.mxu0 0.0
    %605 = vmatpush1.msra.mxu0 0.0
    %606 = vmatprep.subr.mxu0 0.0
    %607 = vmatpush1.msra.mxu0 0.0
    %608 = vmatprep.subr.mxu0 0.0
    %609 = vmatpush1.msra.mxu0 0.0
    %610 = vmatprep.subr.mxu0 0.0
    %611 = vmatpush1.msra.mxu0 0.0
    %612 = vmatprep.subr.mxu0 0.0
    %613 = vmatpush1.msra.mxu0 0.0
    %614 = vmatprep.subr.mxu0 0.0
    %615 = vmatpush1.msra.mxu0 0.0
    %616 = vmatprep.subr.mxu0 0.0
    %617 = vmatpush1.msra.mxu0 0.0
    %618 = vmatprep.mubr.f32.mxu0 0.0
    %619 = vmatmul.mubr.f32.gmra.mrb[0].mxu0 %v552
    %v620 = vpop.f32.mrb[0].mxu0
    %v621 = vadd.f32 %v550, %v620
    %v622 = vpop.f32.mrb[0].mxu0
    %623 = vdwg.mxu0
    %v624 = vmax.f32 %v621, 0.0
    %v625 = vlaneseq
    %v626 = vshrl.u32 %v625, 7
    %v627 = vsub.s32 0, %v626
    %v628 = vrot.slane %v443, %v627
    %v630 = vsel %vm44, %v624, 0
    %632 = vmatprep.subr.mxu0 0.0
    %633 = vmatpush1.msra.mxu0 %v431
    %634 = vmatprep.subr.mxu0 0.0
    %635 = vmatpush1.msra.mxu0 %v432
    %636 = vmatprep.subr.mxu0 0.0
    %637 = vmatpush1.msra.mxu0 %v433
    %638 = vmatprep.subr.mxu0 0.0
    %639 = vmatpush1.msra.mxu0 %v434
    %640 = vmatprep.subr.mxu0 0.0
    %641 = vmatpush1.msra.mxu0 %v435
    %642 = vmatprep.subr.mxu0 0.0
    %643 = vmatpush1.msra.mxu0 %v436
    %644 = vmatprep.subr.mxu0 0.0
    %645 = vmatpush1.msra.mxu0 %v437
    %646 = vmatprep.subr.mxu0 0.0
    %647 = vmatpush1.msra.mxu0 %v438
    %648 = vmatprep.subr.mxu0 0.0
    %649 = vmatpush1.msra.mxu0 0.0
    %650 = vmatprep.subr.mxu0 0.0
    %651 = vmatpush1.msra.mxu0 0.0
    %652 = vmatprep.subr.mxu0 0.0
    %653 = vmatpush1.msra.mxu0 0.0
    %654 = vmatprep.subr.mxu0 0.0
    %655 = vmatpush1.msra.mxu0 0.0
    %656 = vmatprep.subr.mxu0 0.0
    %657 = vmatpush1.msra.mxu0 0.0
    %658 = vmatprep.subr.mxu0 0.0
    %659 = vmatpush1.msra.mxu0 0.0
    %660 = vmatprep.subr.mxu0 0.0
    %661 = vmatpush1.msra.mxu0 0.0
    %662 = vmatprep.subr.mxu0 0.0
    %663 = vmatpush1.msra.mxu0 0.0
    %664 = vmatprep.subr.mxu0 0.0
    %665 = vmatpush1.msra.mxu0 0.0
    %666 = vmatprep.subr.mxu0 0.0
    %667 = vmatpush1.msra.mxu0 0.0
    %668 = vmatprep.subr.mxu0 0.0
    %669 = vmatpush1.msra.mxu0 0.0
    %670 = vmatprep.subr.mxu0 0.0
    %671 = vmatpush1.msra.mxu0 0.0
    %672 = vmatprep.subr.mxu0 0.0
    %673 = vmatpush1.msra.mxu0 0.0
    %674 = vmatprep.subr.mxu0 0.0
    %675 = vmatpush1.msra.mxu0 0.0
    %676 = vmatprep.subr.mxu0 0.0
    %677 = vmatpush1.msra.mxu0 0.0
    %678 = vmatprep.subr.mxu0 0.0
    %679 = vmatpush1.msra.mxu0 0.0
    %680 = vmatprep.subr.mxu0 0.0
    %681 = vmatpush1.msra.mxu0 0.0
    %682 = vmatprep.subr.mxu0 0.0
    %683 = vmatpush1.msra.mxu0 0.0
    %684 = vmatprep.subr.mxu0 0.0
    %685 = vmatpush1.msra.mxu0 0.0
    %686 = vmatprep.subr.mxu0 0.0
    %687 = vmatpush1.msra.mxu0 0.0
    %688 = vmatprep.subr.mxu0 0.0
    %689 = vmatpush1.msra.mxu0 0.0
    %690 = vmatprep.subr.mxu0 0.0
    %691 = vmatpush1.msra.mxu0 0.0
    %692 = vmatprep.subr.mxu0 0.0
    %693 = vmatpush1.msra.mxu0 0.0
    %694 = vmatprep.subr.mxu0 0.0
    %695 = vmatpush1.msra.mxu0 0.0
    %696 = vmatprep.mubr.f32.mxu0 0.0
    %697 = vmatmul.mubr.f32.gmra.mrb[0].mxu0 %v630
    %v698 = vpop.f32.mrb[0].mxu0
    %v699 = vadd.f32 %v628, %v698
    %v700 = vpop.f32.mrb[0].mxu0
    %701 = vdwg.mxu0
    %v702 = vadd.f32 %v546, %v699
    %v703 = vsel %vm145, %v702, 0.0
    %704 = vadd.xlane.f32.xlu0 %v703
    %v705 = vpop.xlane.xlu0 %704
    %v706 = vmul.f32 %v705, %v223
    %v707 = vsub.f32 %v702, %v706
    %v708 = vmul.f32 %v707, %v707
    %v709 = vsel %vm145, %v708, 0.0
    %710 = vadd.xlane.f32.xlu0 %v709
    %v711 = vpop.xlane.xlu0 %710
    %v712 = vmul.f32 %v711, %v223
    %v713 = vadd.f32 %v712, 1e-05
    %v714 = vrsqrt.pop %v713
    %v715 = vmul.f32 %v707, %v714
    %v716 = vlaneseq
    %v717 = vshrl.u32 %v716, 7
    %v718 = vsub.s32 0, %v717
    %v719 = vrot.slane %v444, %v718
    %v720 = vmul.f32 %v715, %v719
    %v721 = vlaneseq
    %v722 = vshrl.u32 %v721, 7
    %v723 = vsub.s32 0, %v722
    %v724 = vrot.slane %v445, %v723
    %v725 = vadd.f32 %v720, %v724
    %v726 = vld [vmem:[#allocation2 + $0x158] sm:$0xff]
    %v727 = vld [vmem:[#allocation2 + $0x160] sm:$0xff]
    %v728 = vld [vmem:[#allocation2 + $0x168] sm:$0xff]
    %v729 = vld [vmem:[#allocation2 + $0x170] sm:$0xff]
    %v730 = vld [vmem:[#allocation2 + $0x178] sm:$0x1]
    %v731 = vlaneseq
    %v732 = vshrl.u32 %v731, 7
    %v733 = vsub.s32 0, %v732
    %v734 = vrot.slane %v730, %v733
    %v736 = vsel %vm145, %v725, 0
    %738 = vmatprep.subr.mxu0 0.0
    %739 = vmatpush1.msra.mxu0 %v726
    %740 = vmatprep.subr.mxu0 0.0
    %741 = vmatpush1.msra.mxu0 %v727
    %742 = vmatprep.subr.mxu0 0.0
    %743 = vmatpush1.msra.mxu0 %v728
    %744 = vmatprep.subr.mxu0 0.0
    %745 = vmatpush1.msra.mxu0 %v729
    %746 = vmatprep.subr.mxu0 0.0
    %747 = vmatpush1.msra.mxu0 0.0
    %748 = vmatprep.subr.mxu0 0.0
    %749 = vmatpush1.msra.mxu0 0.0
    %750 = vmatprep.subr.mxu0 0.0
    %751 = vmatpush1.msra.mxu0 0.0
    %752 = vmatprep.subr.mxu0 0.0
    %753 = vmatpush1.msra.mxu0 0.0
    %754 = vmatprep.subr.mxu0 0.0
    %755 = vmatpush1.msra.mxu0 0.0
    %756 = vmatprep.subr.mxu0 0.0
    %757 = vmatpush1.msra.mxu0 0.0
    %758 = vmatprep.subr.mxu0 0.0
    %759 = vmatpush1.msra.mxu0 0.0
    %760 = vmatprep.subr.mxu0 0.0
    %761 = vmatpush1.msra.mxu0 0.0
    %762 = vmatprep.subr.mxu0 0.0
    %763 = vmatpush1.msra.mxu0 0.0
    %764 = vmatprep.subr.mxu0 0.0
    %765 = vmatpush1.msra.mxu0 0.0
    %766 = vmatprep.subr.mxu0 0.0
    %767 = vmatpush1.msra.mxu0 0.0
    %768 = vmatprep.subr.mxu0 0.0
    %769 = vmatpush1.msra.mxu0 0.0
    %770 = vmatprep.subr.mxu0 0.0
    %771 = vmatpush1.msra.mxu0 0.0
    %772 = vmatprep.subr.mxu0 0.0
    %773 = vmatpush1.msra.mxu0 0.0
    %774 = vmatprep.subr.mxu0 0.0
    %775 = vmatpush1.msra.mxu0 0.0
    %776 = vmatprep.subr.mxu0 0.0
    %777 = vmatpush1.msra.mxu0 0.0
    %778 = vmatprep.subr.mxu0 0.0
    %779 = vmatpush1.msra.mxu0 0.0
    %780 = vmatprep.subr.mxu0 0.0
    %781 = vmatpush1.msra.mxu0 0.0
    %782 = vmatprep.subr.mxu0 0.0
    %783 = vmatpush1.msra.mxu0 0.0
    %784 = vmatprep.subr.mxu0 0.0
    %785 = vmatpush1.msra.mxu0 0.0
    %786 = vmatprep.subr.mxu0 0.0
    %787 = vmatpush1.msra.mxu0 0.0
    %788 = vmatprep.subr.mxu0 0.0
    %789 = vmatpush1.msra.mxu0 0.0
    %790 = vmatprep.subr.mxu0 0.0
    %791 = vmatpush1.msra.mxu0 0.0
    %792 = vmatprep.subr.mxu0 0.0
    %793 = vmatpush1.msra.mxu0 0.0
    %794 = vmatprep.subr.mxu0 0.0
    %795 = vmatpush1.msra.mxu0 0.0
    %796 = vmatprep.subr.mxu0 0.0
    %797 = vmatpush1.msra.mxu0 0.0
    %798 = vmatprep.subr.mxu0 0.0
    %799 = vmatpush1.msra.mxu0 0.0
    %800 = vmatprep.subr.mxu0 0.0
    %801 = vmatpush1.msra.mxu0 0.0
    %802 = vmatprep.mubr.f32.mxu0 0.0
    %803 = vmatmul.mubr.f32.gmra.mrb[0].mxu0 %v736
    %v804 = vpop.f32.mrb[0].mxu0
    %v805 = vadd.f32 %v734, %v804
    %v806 = vpop.f32.mrb[0].mxu0
    %807 = vdwg.mxu0
    %808 = vst [vmem:[#allocation5] sm:$0xff] %v805
    // Predicated region
    $region14: #{tpu_custom_call.1} parent=1 // pred_check
      _
    $region15: #{tpu_custom_call.1} parent=1 // pred_check_branch
      %810 = sbr.rel (0) target = $region17
    $region16: #{tpu_custom_call.1} parent=1 // pred_region
      %s812 = ssub.s32 128, 128
      %813 = vsyncadd [#allocation4], %s812
      %s815 = sshll.u32 [#allocation5], 4
      %s816 = int_to_ptr.vmem [resolvable:$true] %s815
      %818 = dma.vmem_to_hbm [thread:$0]  %s816, 128, %s2, [#allocation4]
    $region17: #{tpu_custom_call.1} parent=1 // pred_fallthru
      _
    // Predicated region
    $region18: #{tpu_custom_call.1} parent=1 // pred_check
      _
    $region19: #{tpu_custom_call.1} parent=1 // pred_check_branch
      %820 = sbr.rel (0) target = $region21
    $region20: #{tpu_custom_call.1} parent=1 // pred_region
      %821 = dma.done [#allocation4], 128
    $region21: #{tpu_custom_call.1} parent=1 // pred_fallthru
      _
    %822 = vsyncpa [#allocation3], 1
    %823 = vsyncpa [#allocation4], 1

</llo_original>
